<compile_context>
chip_gen: v5e
topology: v5e:2x2
jax: 0.10.0
libtpu: 0.0.40
codegen_flags: <defaults>
</compile_context>

<pallas_src>
import functools

import jax
import jax.numpy as jnp
from jax.experimental import pallas as pl
from jax.experimental.pallas import tpu as pltpu

# MXU operand dtype.  jnp.bfloat16 gives ~2x matmul throughput on v6e/v7x and
# halves operand DMA bytes; kept at f32 here so the strict numerical check
# against the f32 reference stays comfortably inside tolerance.
# TODO(synk): flip to jnp.bfloat16 on v6e/v7x if the accuracy budget allows.
_MXU_DTYPE = jnp.float32


# ----------------------------------------------------------------------------
# Per-generation budgets / tile sizing
# ----------------------------------------------------------------------------
@functools.lru_cache(maxsize=None)
def _vmem_limit_bytes():
    try:
        cap = pltpu.get_tpu_info().vmem_capacity_bytes
        return int(min(cap * 3 // 4, 96 * 1024 * 1024))   # 96 MiB v5e/v6e, 48 MiB v7x
    except Exception:
        return 48 * 1024 * 1024                            # safe on every generation


def _pick_batch_block(batch, bytes_per_row, reserved_bytes):
    """Largest batch block that fits the VMEM budget, divides the batch and
    (when possible) leaves >= 2 grid steps to feed both v7x TensorCores."""
    budget = max(_vmem_limit_bytes() - reserved_bytes, bytes_per_row)
    bb = max(1, min(batch, budget // max(bytes_per_row, 1)))
    if batch >= 2:
        bb = min(bb, -(-batch // 2))        # ceil(batch/2)  ->  >= 2 grid steps
    while batch % bb:                        # exact blocks (no ragged edge)
        bb -= 1
    return int(bb)


# ----------------------------------------------------------------------------
# Fused SRU layer kernel:
#   U = X W                                   (one matmul, all gates)
#   f = sigmoid(U[:, D:2D] + bf) ; r = sigmoid(U[:, 2D:3D] + br)
#   c_t = f_t * c_{t-1} + (1 - f_t) * x_tilde_t
#   h_t = r_t * tanh(c_t) + (1 - r_t) * x_t   (highway, dim_in == dim_out)
# ----------------------------------------------------------------------------
def sru_layer_kernel(x_ref, w_ref, b_ref, h_ref, xt_s, f_s, r_s):
    BB, T, D = x_ref.shape

    # --- hoisted projection: one (BB*T, D) x (D, 3D) matmul for all gates ---
    # (the reshape keeps D as the last/lane dim; it is a free view when T is a
    #  multiple of the 8-sublane tile, which holds for the sizes used here)
    x2 = x_ref[...].reshape(BB * T, D)
    u = jnp.dot(x2.astype(_MXU_DTYPE), w_ref[...].astype(_MXU_DTYPE),
                preferred_element_type=jnp.float32)                 # (BB*T, 3D)

    # bias + sigmoid applied once per block (outside the time loop);
    # gates stay in VMEM scratch -> no HBM round trip.
    xt_s[...] = u[:, 0:D].reshape(BB, T, D)
    f_s[...] = jax.nn.sigmoid(u[:, D:2 * D] + b_ref[0:1, :]).reshape(BB, T, D)
    r_s[...] = jax.nn.sigmoid(u[:, 2 * D:3 * D] + b_ref[1:2, :]).reshape(BB, T, D)

    # --- elementwise time recurrence, cell state carried as a value ---
    def step(t, c):
        ts = pl.ds(t, 1)
        f = f_s[:, ts, :]                                            # (BB, 1, D)
        r = r_s[:, ts, :]
        c_new = f * c + (1.0 - f) * xt_s[:, ts, :]
        h_ref[:, ts, :] = r * jnp.tanh(c_new) + (1.0 - r) * x_ref[:, ts, :]
        return c_new

    c0 = jnp.zeros((BB, 1, D), jnp.float32)
    jax.lax.fori_loop(0, T, step, c0, unroll=True if T <= 32 else 8)


def sru_layer(x_btd, w, b):
    B, T, D = x_btd.shape
    # per batch row: x block + h block (double-buffered) + 3 gate scratches
    bytes_per_row = T * D * 4 * (2 + 2 + 3)
    reserved = (w.size + b.size) * 4 * 2 + (2 << 20)
    BB = _pick_batch_block(B, bytes_per_row, reserved)
    blk = pl.BlockSpec((BB, T, D), lambda i: (i, 0, 0))
    return pl.pallas_call(
        sru_layer_kernel,
        out_shape=jax.ShapeDtypeStruct((B, T, D), jnp.float32),
        grid_spec=pltpu.PrefetchScalarGridSpec(
            num_scalar_prefetch=0,
            grid=(B // BB,),
            in_specs=[blk,
                      pl.BlockSpec((D, 3 * D), lambda i: (0, 0)),
                      pl.BlockSpec((2, D), lambda i: (0, 0))],
            out_specs=blk,
            scratch_shapes=[pltpu.VMEM((BB, T, D), jnp.float32)] * 3),
        compiler_params=pltpu.CompilerParams(
            dimension_semantics=("parallel",),
            vmem_limit_bytes=_vmem_limit_bytes()),
    )(x_btd, w, b)


# ----------------------------------------------------------------------------
# Attention + head kernel (one batch block per grid step):
#   hbar   = tanh(x @ ws1^T)         alphas = hbar @ ws2^T
#   per hop h: softmax over T (T on lanes) of alphas[...,h] + length bias
#              out_h = sum_t attn_h[:, t] * x[:, t, :]      (VPU/XLU)
#   out = concat_h(out_h) @ fc_w^T + fc_b                    (single matmul)
# ----------------------------------------------------------------------------
def attn_kernel(bias_ref, x_ref, w1_ref, w2_ref, fcw_ref, fcb_ref,
                out_ref, attn_ref):
    BB, T, D = x_ref.shape
    HOP = attn_ref.shape[1]

    xb = x_ref[...]                                                  # (BB, T, D)
    x2 = xb.reshape(BB * T, D)
    hbar = jnp.tanh(jnp.dot(x2.astype(_MXU_DTYPE), w1_ref[...].astype(_MXU_DTYPE),
                            preferred_element_type=jnp.float32))     # (BB*T, H)
    alphas = jnp.dot(hbar.astype(_MXU_DTYPE), w2_ref[...].astype(_MXU_DTYPE),
                     preferred_element_type=jnp.float32)             # (BB*T, HOP)
    alphas = alphas.reshape(BB, T, HOP)

    bias = bias_ref[:, 0, :]                         # (BB, T): 0 valid / -1e30 pad

    parts = []
    for h in range(HOP):                             # HOP is small and static
        a_h = alphas[:, :, h] + bias                 # (BB, T)  -- T on the lane axis
        m = jnp.max(a_h, axis=1, keepdims=True)
        e = jnp.exp(a_h - m)
        s = jnp.sum(e, axis=1, keepdims=True)
        attn_h = e * pl.reciprocal(s, approx=True)   # (BB, T)
        attn_ref[:, h, :] = attn_h                   # lane-dense (B, HOP, T) store
        # out_h = sum_t attn_h * x  (VPU multiply + XLU reduce; an MXU matmul
        # with M=HOP=4 would use <2% of the MXU rows)
        parts.append(jnp.sum(attn_h[:, :, None] * xb, axis=1))       # (BB, D)

    out_flat = jnp.concatenate(parts, axis=1)        # (BB, HOP*D), hop-major
    out = jnp.dot(out_flat.astype(_MXU_DTYPE), fcw_ref[...].astype(_MXU_DTYPE),
                  preferred_element_type=jnp.float32) + fcb_ref[...]
    out_ref[:, 0, :] = out


def attn_head(x_btd, mask_bias, w1t, w2t, fcw_t, fcb):
    B, T, D = x_btd.shape
    H = w1t.shape[1]
    HOP = w2t.shape[1]
    bytes_per_row = (T * D * 2 + HOP * T * 2 + T * 2 + D * 2) * 4
    reserved = (w1t.size + w2t.size + fcw_t.size + fcb.size) * 4 * 2 + (2 << 20)
    BB = _pick_batch_block(B, bytes_per_row, reserved)
    out3, attn = pl.pallas_call(
        attn_kernel,
        out_shape=(jax.ShapeDtypeStruct((B, 1, D), jnp.float32),
                   jax.ShapeDtypeStruct((B, HOP, T), jnp.float32)),
        grid_spec=pltpu.PrefetchScalarGridSpec(
            num_scalar_prefetch=0,
            grid=(B // BB,),
            in_specs=[
                pl.BlockSpec((BB, 1, T), lambda i: (i, 0, 0)),
                pl.BlockSpec((BB, T, D), lambda i: (i, 0, 0)),
                pl.BlockSpec((D, H), lambda i: (0, 0)),
                pl.BlockSpec((H, HOP), lambda i: (0, 0)),
                pl.BlockSpec((HOP * D, D), lambda i: (0, 0)),
                pl.BlockSpec((1, D), lambda i: (0, 0)),
            ],
            out_specs=[
                pl.BlockSpec((BB, 1, D), lambda i: (i, 0, 0)),
                pl.BlockSpec((BB, HOP, T), lambda i: (i, 0, 0)),
            ]),
        compiler_params=pltpu.CompilerParams(
            dimension_semantics=("parallel",),
            vmem_limit_bytes=_vmem_limit_bytes()),
    )(mask_bias, x_btd, w1t, w2t, fcw_t, fcb)
    return out3[:, 0, :], attn


# ----------------------------------------------------------------------------
# Full SruEmb forward (glue in plain JAX)
# ----------------------------------------------------------------------------
def sru_emb_forward(params, inp, lg=None):   # `lg` is unused, as in the module
    B, T, _ = inp.shape
    # _process_lengths: length_i = T - #(input[i, :, 0] == 0)
    lengths = T - jnp.sum((inp[:, :, 0] == 0).astype(jnp.int32), axis=1)

    x = inp.astype(jnp.float32)              # stays (B, T, D) throughout
    for (w, b) in params["sru"]:
        x = sru_layer(x, w, b)

    D = params["fc_b"].shape[0]
    # additive length mask: 0 where valid, large finite negative where padded
    # (avoids NaN for fully-masked rows, unlike -inf in the reference)
    mask_bias = jnp.where(
        jnp.arange(T, dtype=jnp.int32)[None, :] >= lengths[:, None],
        jnp.float32(-1e30), jnp.float32(0.0)).reshape(B, 1, T)

    out, attn = attn_head(x, mask_bias,
                          params["ws1"].T,            # (D, H)
                          params["ws2"].T,            # (H, HOP)
                          params["fc_w"].T,           # (HOP*D, D)
                          params["fc_b"].reshape(1, D))
    return out, attn


# ----------------------------------------------------------------------------
# Pure-JAX reference (for a sanity check)
# ----------------------------------------------------------------------------
def forward_ref(params, inp):
    B, T, _ = inp.shape
    lengths = T - jnp.sum((inp[:, :, 0] == 0).astype(jnp.int32), axis=1)
    x = jnp.transpose(inp, (1, 0, 2))
    for (w, b) in params["sru"]:
        _, Bc, D = x.shape
        u = jnp.einsum("tbd,de->tbe", x, w)
        bf, br = b[0], b[1]

        def step(c, tb):
            ut, xt = tb
            x_tilde = ut[:, :D]
            f = jax.nn.sigmoid(ut[:, D:2 * D] + bf)
            r = jax.nn.sigmoid(ut[:, 2 * D:3 * D] + br)
            c_new = f * c + (1 - f) * x_tilde
            h = r * jnp.tanh(c_new) + (1 - r) * xt
            return c_new, h

        _, hs = jax.lax.scan(step, jnp.zeros((Bc, D), jnp.float32), (u, x))
        x = hs
    x = jnp.transpose(x, (1, 0, 2))                            # (B, T, D)
    hbar = jnp.tanh(x @ params["ws1"].T)
    alphas = jnp.transpose(hbar @ params["ws2"].T, (0, 2, 1))  # (B, hop, T)
    mask = jnp.arange(T)[None, None, :] >= lengths[:, None, None]
    attn = jax.nn.softmax(jnp.where(mask, -jnp.inf, alphas), axis=2)
    out = jnp.einsum("bht,btd->bhd", attn, x).reshape(B, -1)
    out = out @ params["fc_w"].T + params["fc_b"]
    return out, attn


# ----------------------------------------------------------------------------
if __name__ == "__main__":
    B, T = 2, 8                 # batch, sequence length
    D_IN = 32                   # embedding dim_in (== args.dimemb so SRU k=3)
    D = 32                      # args.dimemb (dim_out)
    H = 16                      # args.attn_hidden
    HOP = 4                     # args.attn_hop
    NLAYERS = 2                 # args.sru

    key = jax.random.PRNGKey(0)
    ks = jax.random.split(key, 2 * NLAYERS + 5)

    params = {
        "sru": [
            (0.3 * jax.random.normal(ks[2 * l], (D, 3 * D), jnp.float32),
             0.1 * jax.random.normal(ks[2 * l + 1], (2, D), jnp.float32))
            for l in range(NLAYERS)
        ],
        "ws1": 0.3 * jax.random.normal(ks[-5], (H, D), jnp.float32),     # Linear(D->H)
        "ws2": 0.3 * jax.random.normal(ks[-4], (HOP, H), jnp.float32),   # Linear(H->hop)
        "fc_w": 0.3 * jax.random.normal(ks[-3], (D, HOP * D), jnp.float32),
        "fc_b": 0.1 * jax.random.normal(ks[-2], (D,), jnp.float32),
    }

    inp = jax.random.normal(ks[-1], (B, T, D_IN), jnp.float32)
    # make batch element 1 have 2 "non-word" (all-zero) trailing timesteps
    inp = inp.at[1, 6:, :].set(0.0)

    out, attn = sru_emb_forward(params, inp, lg=None)
    out, attn = jax.block_until_ready((out, attn))

    ref_out, ref_attn = forward_ref(params, inp)
    assert out.shape == (B, D) and attn.shape == (B, HOP, T)
    assert jnp.allclose(out, ref_out, atol=2e-2, rtol=2e-2)
    assert jnp.allclose(attn, ref_attn, atol=2e-2, rtol=2e-2)

    print("KERNEL_OK")
</pallas_src>

<mosaic_0001>
module attributes {stable_mosaic.version = 11 : i64} {
  func.func @sru_layer_kernel(%arg0: i32, %arg1: memref<1x8x32xf32, #tpu.memory_space<vmem>>, %arg2: memref<32x96xf32, #tpu.memory_space<vmem>>, %arg3: memref<2x32xf32, #tpu.memory_space<vmem>>, %arg4: memref<1x8x32xf32, #tpu.memory_space<vmem>>, %arg5: memref<1x8x32xf32, #tpu.memory_space<vmem>>, %arg6: memref<1x8x32xf32, #tpu.memory_space<vmem>>, %arg7: memref<1x8x32xf32, #tpu.memory_space<vmem>>) attributes {dimension_semantics = [#tpu.dimension_semantics<parallel>], iteration_bounds = array<i64: 2>, scalar_prefetch = 0 : i64, scratch_operands = 3 : i64, tpu.core_type = #tpu.core_type<tc>, window_params = [{transform_indices = @transform_0, window_bounds = array<i64: 1, 8, 32>}, {pipeline_mode = #tpu.pipeline_mode<synchronous>, transform_indices = @transform_1, window_bounds = array<i64: 32, 96>}, {pipeline_mode = #tpu.pipeline_mode<synchronous>, transform_indices = @transform_2, window_bounds = array<i64: 2, 32>}, {transform_indices = @transform_3, window_bounds = array<i64: 1, 8, 32>}]} {
    %c0 = arith.constant 0 : index
    %c0_0 = arith.constant 0 : index
    %c0_1 = arith.constant 0 : index
    %0 = vector.load %arg1[%c0, %c0_0, %c0_1] : memref<1x8x32xf32, #tpu.memory_space<vmem>>, vector<1x8x32xf32>
    %1 = vector.shape_cast %0 : vector<1x8x32xf32> to vector<8x32xf32>
    %c0_2 = arith.constant 0 : index
    %c0_3 = arith.constant 0 : index
    %2 = vector.load %arg2[%c0_2, %c0_3] : memref<32x96xf32, #tpu.memory_space<vmem>>, vector<32x96xf32>
    %cst = arith.constant dense<0.000000e+00> : vector<8x96xf32>
    %3 = tpu.matmul %1, %2, %cst {dimension_numbers = #tpu.dot_dimension_numbers<[1], [0], [0], [1], [0, 0, 1, 1], [], []>} : vector<8x32xf32>, vector<32x96xf32>, vector<8x96xf32> -> vector<8x96xf32>
    %4 = vector.extract_strided_slice %3 {offsets = [0, 0], sizes = [8, 32], strides = [1, 1]} : vector<8x96xf32> to vector<8x32xf32>
    %5 = vector.shape_cast %4 : vector<8x32xf32> to vector<1x8x32xf32>
    %c0_4 = arith.constant 0 : index
    %c0_5 = arith.constant 0 : index
    %c0_6 = arith.constant 0 : index
    %6 = vector.load %arg5[%c0_4, %c0_5, %c0_6] : memref<1x8x32xf32, #tpu.memory_space<vmem>>, vector<1x8x32xf32>
    tpu.vector_store %arg5[%c0_4, %c0_5, %c0_6], %5 {strides = array<i32>} : memref<1x8x32xf32, #tpu.memory_space<vmem>>, vector<1x8x32xf32>,
    %7 = vector.extract_strided_slice %3 {offsets = [0, 32], sizes = [8, 32], strides = [1, 1]} : vector<8x96xf32> to vector<8x32xf32>
    %c0_7 = arith.constant 0 : index
    %c0_8 = arith.constant 0 : index
    %8 = vector.load %arg3[%c0_7, %c0_8] : memref<2x32xf32, #tpu.memory_space<vmem>>, vector<1x32xf32>
    %9 = vector.broadcast %8 : vector<1x32xf32> to vector<8x32xf32>
    %10 = arith.addf %7, %9 : vector<8x32xf32>
    %11 = arith.negf %10 : vector<8x32xf32>
    %12 = math.exp %11 : vector<8x32xf32>
    %cst_9 = arith.constant 1.000000e+00 : f32
    %13 = vector.broadcast %cst_9 : f32 to vector<8x32xf32>
    %14 = arith.addf %13, %12 : vector<8x32xf32>
    %15 = arith.divf %13, %14 : vector<8x32xf32>
    %16 = vector.shape_cast %15 : vector<8x32xf32> to vector<1x8x32xf32>
    %c0_10 = arith.constant 0 : index
    %c0_11 = arith.constant 0 : index
    %c0_12 = arith.constant 0 : index
    %17 = vector.load %arg6[%c0_10, %c0_11, %c0_12] : memref<1x8x32xf32, #tpu.memory_space<vmem>>, vector<1x8x32xf32>
    tpu.vector_store %arg6[%c0_10, %c0_11, %c0_12], %16 {strides = array<i32>} : memref<1x8x32xf32, #tpu.memory_space<vmem>>, vector<1x8x32xf32>,
    %18 = vector.extract_strided_slice %3 {offsets = [0, 64], sizes = [8, 32], strides = [1, 1]} : vector<8x96xf32> to vector<8x32xf32>
    %c1 = arith.constant 1 : index
    %c0_13 = arith.constant 0 : index
    %19 = vector.load %arg3[%c1, %c0_13] : memref<2x32xf32, #tpu.memory_space<vmem>>, vector<1x32xf32>
    %20 = vector.broadcast %19 : vector<1x32xf32> to vector<8x32xf32>
    %21 = arith.addf %18, %20 : vector<8x32xf32>
    %22 = arith.negf %21 : vector<8x32xf32>
    %23 = math.exp %22 : vector<8x32xf32>
    %cst_14 = arith.constant 1.000000e+00 : f32
    %24 = vector.broadcast %cst_14 : f32 to vector<8x32xf32>
    %25 = arith.addf %24, %23 : vector<8x32xf32>
    %26 = arith.divf %24, %25 : vector<8x32xf32>
    %27 = vector.shape_cast %26 : vector<8x32xf32> to vector<1x8x32xf32>
    %c0_15 = arith.constant 0 : index
    %c0_16 = arith.constant 0 : index
    %c0_17 = arith.constant 0 : index
    %28 = vector.load %arg7[%c0_15, %c0_16, %c0_17] : memref<1x8x32xf32, #tpu.memory_space<vmem>>, vector<1x8x32xf32>
    tpu.vector_store %arg7[%c0_15, %c0_16, %c0_17], %27 {strides = array<i32>} : memref<1x8x32xf32, #tpu.memory_space<vmem>>, vector<1x8x32xf32>,
    %cst_18 = arith.constant 0.000000e+00 : f32
    %29 = vector.broadcast %cst_18 : f32 to vector<1x1x32xf32>
    %c0_i32 = arith.constant 0 : i32
    %c0_19 = arith.constant 0 : index
    %30 = arith.index_cast %c0_i32 : i32 to index
    %c0_20 = arith.constant 0 : index
    %31 = vector.load %arg6[%c0_19, %30, %c0_20] : memref<1x8x32xf32, #tpu.memory_space<vmem>>, vector<1x1x32xf32>
    %c0_21 = arith.constant 0 : index
    %32 = arith.index_cast %c0_i32 : i32 to index
    %c0_22 = arith.constant 0 : index
    %33 = vector.load %arg7[%c0_21, %32, %c0_22] : memref<1x8x32xf32, #tpu.memory_space<vmem>>, vector<1x1x32xf32>
    %34 = arith.mulf %31, %29 : vector<1x1x32xf32>
    %cst_23 = arith.constant 1.000000e+00 : f32
    %35 = vector.broadcast %cst_23 : f32 to vector<1x1x32xf32>
    %36 = arith.subf %35, %31 : vector<1x1x32xf32>
    %c0_24 = arith.constant 0 : index
    %37 = arith.index_cast %c0_i32 : i32 to index
    %c0_25 = arith.constant 0 : index
    %38 = vector.load %arg5[%c0_24, %37, %c0_25] : memref<1x8x32xf32, #tpu.memory_space<vmem>>, vector<1x1x32xf32>
    %39 = arith.mulf %36, %38 : vector<1x1x32xf32>
    %40 = arith.addf %34, %39 : vector<1x1x32xf32>
    %41 = math.tanh %40 : vector<1x1x32xf32>
    %42 = arith.mulf %33, %41 : vector<1x1x32xf32>
    %cst_26 = arith.constant 1.000000e+00 : f32
    %43 = vector.broadcast %cst_26 : f32 to vector<1x1x32xf32>
    %44 = arith.subf %43, %33 : vector<1x1x32xf32>
    %c0_27 = arith.constant 0 : index
    %45 = arith.index_cast %c0_i32 : i32 to index
    %c0_28 = arith.constant 0 : index
    %46 = vector.load %arg1[%c0_27, %45, %c0_28] : memref<1x8x32xf32, #tpu.memory_space<vmem>>, vector<1x1x32xf32>
    %47 = arith.mulf %44, %46 : vector<1x1x32xf32>
    %48 = arith.addf %42, %47 : vector<1x1x32xf32>
    %c0_29 = arith.constant 0 : index
    %49 = arith.index_cast %c0_i32 : i32 to index
    %c0_30 = arith.constant 0 : index
    %50 = vector.load %arg4[%c0_29, %49, %c0_30] : memref<1x8x32xf32, #tpu.memory_space<vmem>>, vector<1x1x32xf32>
    tpu.vector_store %arg4[%c0_29, %49, %c0_30], %48 {strides = array<i32>} : memref<1x8x32xf32, #tpu.memory_space<vmem>>, vector<1x1x32xf32>,
    %c1_i32 = arith.constant 1 : i32
    %c0_31 = arith.constant 0 : index
    %51 = arith.index_cast %c1_i32 : i32 to index
    %c0_32 = arith.constant 0 : index
    %52 = vector.load %arg6[%c0_31, %51, %c0_32] : memref<1x8x32xf32, #tpu.memory_space<vmem>>, vector<1x1x32xf32>
    %c0_33 = arith.constant 0 : index
    %53 = arith.index_cast %c1_i32 : i32 to index
    %c0_34 = arith.constant 0 : index
    %54 = vector.load %arg7[%c0_33, %53, %c0_34] : memref<1x8x32xf32, #tpu.memory_space<vmem>>, vector<1x1x32xf32>
    %55 = arith.mulf %52, %40 : vector<1x1x32xf32>
    %cst_35 = arith.constant 1.000000e+00 : f32
    %56 = vector.broadcast %cst_35 : f32 to vector<1x1x32xf32>
    %57 = arith.subf %56, %52 : vector<1x1x32xf32>
    %c0_36 = arith.constant 0 : index
    %58 = arith.index_cast %c1_i32 : i32 to index
    %c0_37 = arith.constant 0 : index
    %59 = vector.load %arg5[%c0_36, %58, %c0_37] : memref<1x8x32xf32, #tpu.memory_space<vmem>>, vector<1x1x32xf32>
    %60 = arith.mulf %57, %59 : vector<1x1x32xf32>
    %61 = arith.addf %55, %60 : vector<1x1x32xf32>
    %62 = math.tanh %61 : vector<1x1x32xf32>
    %63 = arith.mulf %54, %62 : vector<1x1x32xf32>
    %cst_38 = arith.constant 1.000000e+00 : f32
    %64 = vector.broadcast %cst_38 : f32 to vector<1x1x32xf32>
    %65 = arith.subf %64, %54 : vector<1x1x32xf32>
    %c0_39 = arith.constant 0 : index
    %66 = arith.index_cast %c1_i32 : i32 to index
    %c0_40 = arith.constant 0 : index
    %67 = vector.load %arg1[%c0_39, %66, %c0_40] : memref<1x8x32xf32, #tpu.memory_space<vmem>>, vector<1x1x32xf32>
    %68 = arith.mulf %65, %67 : vector<1x1x32xf32>
    %69 = arith.addf %63, %68 : vector<1x1x32xf32>
    %c0_41 = arith.constant 0 : index
    %70 = arith.index_cast %c1_i32 : i32 to index
    %c0_42 = arith.constant 0 : index
    %71 = vector.load %arg4[%c0_41, %70, %c0_42] : memref<1x8x32xf32, #tpu.memory_space<vmem>>, vector<1x1x32xf32>
    tpu.vector_store %arg4[%c0_41, %70, %c0_42], %69 {strides = array<i32>} : memref<1x8x32xf32, #tpu.memory_space<vmem>>, vector<1x1x32xf32>,
    %c2_i32 = arith.constant 2 : i32
    %c0_43 = arith.constant 0 : index
    %72 = arith.index_cast %c2_i32 : i32 to index
    %c0_44 = arith.constant 0 : index
    %73 = vector.load %arg6[%c0_43, %72, %c0_44] : memref<1x8x32xf32, #tpu.memory_space<vmem>>, vector<1x1x32xf32>
    %c0_45 = arith.constant 0 : index
    %74 = arith.index_cast %c2_i32 : i32 to index
    %c0_46 = arith.constant 0 : index
    %75 = vector.load %arg7[%c0_45, %74, %c0_46] : memref<1x8x32xf32, #tpu.memory_space<vmem>>, vector<1x1x32xf32>
    %76 = arith.mulf %73, %61 : vector<1x1x32xf32>
    %cst_47 = arith.constant 1.000000e+00 : f32
    %77 = vector.broadcast %cst_47 : f32 to vector<1x1x32xf32>
    %78 = arith.subf %77, %73 : vector<1x1x32xf32>
    %c0_48 = arith.constant 0 : index
    %79 = arith.index_cast %c2_i32 : i32 to index
    %c0_49 = arith.constant 0 : index
    %80 = vector.load %arg5[%c0_48, %79, %c0_49] : memref<1x8x32xf32, #tpu.memory_space<vmem>>, vector<1x1x32xf32>
    %81 = arith.mulf %78, %80 : vector<1x1x32xf32>
    %82 = arith.addf %76, %81 : vector<1x1x32xf32>
    %83 = math.tanh %82 : vector<1x1x32xf32>
    %84 = arith.mulf %75, %83 : vector<1x1x32xf32>
    %cst_50 = arith.constant 1.000000e+00 : f32
    %85 = vector.broadcast %cst_50 : f32 to vector<1x1x32xf32>
    %86 = arith.subf %85, %75 : vector<1x1x32xf32>
    %c0_51 = arith.constant 0 : index
    %87 = arith.index_cast %c2_i32 : i32 to index
    %c0_52 = arith.constant 0 : index
    %88 = vector.load %arg1[%c0_51, %87, %c0_52] : memref<1x8x32xf32, #tpu.memory_space<vmem>>, vector<1x1x32xf32>
    %89 = arith.mulf %86, %88 : vector<1x1x32xf32>
    %90 = arith.addf %84, %89 : vector<1x1x32xf32>
    %c0_53 = arith.constant 0 : index
    %91 = arith.index_cast %c2_i32 : i32 to index
    %c0_54 = arith.constant 0 : index
    %92 = vector.load %arg4[%c0_53, %91, %c0_54] : memref<1x8x32xf32, #tpu.memory_space<vmem>>, vector<1x1x32xf32>
    tpu.vector_store %arg4[%c0_53, %91, %c0_54], %90 {strides = array<i32>} : memref<1x8x32xf32, #tpu.memory_space<vmem>>, vector<1x1x32xf32>,
    %c3_i32 = arith.constant 3 : i32
    %c0_55 = arith.constant 0 : index
    %93 = arith.index_cast %c3_i32 : i32 to index
    %c0_56 = arith.constant 0 : index
    %94 = vector.load %arg6[%c0_55, %93, %c0_56] : memref<1x8x32xf32, #tpu.memory_space<vmem>>, vector<1x1x32xf32>
    %c0_57 = arith.constant 0 : index
    %95 = arith.index_cast %c3_i32 : i32 to index
    %c0_58 = arith.constant 0 : index
    %96 = vector.load %arg7[%c0_57, %95, %c0_58] : memref<1x8x32xf32, #tpu.memory_space<vmem>>, vector<1x1x32xf32>
    %97 = arith.mulf %94, %82 : vector<1x1x32xf32>
    %cst_59 = arith.constant 1.000000e+00 : f32
    %98 = vector.broadcast %cst_59 : f32 to vector<1x1x32xf32>
    %99 = arith.subf %98, %94 : vector<1x1x32xf32>
    %c0_60 = arith.constant 0 : index
    %100 = arith.index_cast %c3_i32 : i32 to index
    %c0_61 = arith.constant 0 : index
    %101 = vector.load %arg5[%c0_60, %100, %c0_61] : memref<1x8x32xf32, #tpu.memory_space<vmem>>, vector<1x1x32xf32>
    %102 = arith.mulf %99, %101 : vector<1x1x32xf32>
    %103 = arith.addf %97, %102 : vector<1x1x32xf32>
    %104 = math.tanh %103 : vector<1x1x32xf32>
    %105 = arith.mulf %96, %104 : vector<1x1x32xf32>
    %cst_62 = arith.constant 1.000000e+00 : f32
    %106 = vector.broadcast %cst_62 : f32 to vector<1x1x32xf32>
    %107 = arith.subf %106, %96 : vector<1x1x32xf32>
    %c0_63 = arith.constant 0 : index
    %108 = arith.index_cast %c3_i32 : i32 to index
    %c0_64 = arith.constant 0 : index
    %109 = vector.load %arg1[%c0_63, %108, %c0_64] : memref<1x8x32xf32, #tpu.memory_space<vmem>>, vector<1x1x32xf32>
    %110 = arith.mulf %107, %109 : vector<1x1x32xf32>
    %111 = arith.addf %105, %110 : vector<1x1x32xf32>
    %c0_65 = arith.constant 0 : index
    %112 = arith.index_cast %c3_i32 : i32 to index
    %c0_66 = arith.constant 0 : index
    %113 = vector.load %arg4[%c0_65, %112, %c0_66] : memref<1x8x32xf32, #tpu.memory_space<vmem>>, vector<1x1x32xf32>
    tpu.vector_store %arg4[%c0_65, %112, %c0_66], %111 {strides = array<i32>} : memref<1x8x32xf32, #tpu.memory_space<vmem>>, vector<1x1x32xf32>,
    %c4_i32 = arith.constant 4 : i32
    %c0_67 = arith.constant 0 : index
    %114 = arith.index_cast %c4_i32 : i32 to index
    %c0_68 = arith.constant 0 : index
    %115 = vector.load %arg6[%c0_67, %114, %c0_68] : memref<1x8x32xf32, #tpu.memory_space<vmem>>, vector<1x1x32xf32>
    %c0_69 = arith.constant 0 : index
    %116 = arith.index_cast %c4_i32 : i32 to index
    %c0_70 = arith.constant 0 : index
    %117 = vector.load %arg7[%c0_69, %116, %c0_70] : memref<1x8x32xf32, #tpu.memory_space<vmem>>, vector<1x1x32xf32>
    %118 = arith.mulf %115, %103 : vector<1x1x32xf32>
    %cst_71 = arith.constant 1.000000e+00 : f32
    %119 = vector.broadcast %cst_71 : f32 to vector<1x1x32xf32>
    %120 = arith.subf %119, %115 : vector<1x1x32xf32>
    %c0_72 = arith.constant 0 : index
    %121 = arith.index_cast %c4_i32 : i32 to index
    %c0_73 = arith.constant 0 : index
    %122 = vector.load %arg5[%c0_72, %121, %c0_73] : memref<1x8x32xf32, #tpu.memory_space<vmem>>, vector<1x1x32xf32>
    %123 = arith.mulf %120, %122 : vector<1x1x32xf32>
    %124 = arith.addf %118, %123 : vector<1x1x32xf32>
    %125 = math.tanh %124 : vector<1x1x32xf32>
    %126 = arith.mulf %117, %125 : vector<1x1x32xf32>
    %cst_74 = arith.constant 1.000000e+00 : f32
    %127 = vector.broadcast %cst_74 : f32 to vector<1x1x32xf32>
    %128 = arith.subf %127, %117 : vector<1x1x32xf32>
    %c0_75 = arith.constant 0 : index
    %129 = arith.index_cast %c4_i32 : i32 to index
    %c0_76 = arith.constant 0 : index
    %130 = vector.load %arg1[%c0_75, %129, %c0_76] : memref<1x8x32xf32, #tpu.memory_space<vmem>>, vector<1x1x32xf32>
    %131 = arith.mulf %128, %130 : vector<1x1x32xf32>
    %132 = arith.addf %126, %131 : vector<1x1x32xf32>
    %c0_77 = arith.constant 0 : index
    %133 = arith.index_cast %c4_i32 : i32 to index
    %c0_78 = arith.constant 0 : index
    %134 = vector.load %arg4[%c0_77, %133, %c0_78] : memref<1x8x32xf32, #tpu.memory_space<vmem>>, vector<1x1x32xf32>
    tpu.vector_store %arg4[%c0_77, %133, %c0_78], %132 {strides = array<i32>} : memref<1x8x32xf32, #tpu.memory_space<vmem>>, vector<1x1x32xf32>,
    %c5_i32 = arith.constant 5 : i32
    %c0_79 = arith.constant 0 : index
    %135 = arith.index_cast %c5_i32 : i32 to index
    %c0_80 = arith.constant 0 : index
    %136 = vector.load %arg6[%c0_79, %135, %c0_80] : memref<1x8x32xf32, #tpu.memory_space<vmem>>, vector<1x1x32xf32>
    %c0_81 = arith.constant 0 : index
    %137 = arith.index_cast %c5_i32 : i32 to index
    %c0_82 = arith.constant 0 : index
    %138 = vector.load %arg7[%c0_81, %137, %c0_82] : memref<1x8x32xf32, #tpu.memory_space<vmem>>, vector<1x1x32xf32>
    %139 = arith.mulf %136, %124 : vector<1x1x32xf32>
    %cst_83 = arith.constant 1.000000e+00 : f32
    %140 = vector.broadcast %cst_83 : f32 to vector<1x1x32xf32>
    %141 = arith.subf %140, %136 : vector<1x1x32xf32>
    %c0_84 = arith.constant 0 : index
    %142 = arith.index_cast %c5_i32 : i32 to index
    %c0_85 = arith.constant 0 : index
    %143 = vector.load %arg5[%c0_84, %142, %c0_85] : memref<1x8x32xf32, #tpu.memory_space<vmem>>, vector<1x1x32xf32>
    %144 = arith.mulf %141, %143 : vector<1x1x32xf32>
    %145 = arith.addf %139, %144 : vector<1x1x32xf32>
    %146 = math.tanh %145 : vector<1x1x32xf32>
    %147 = arith.mulf %138, %146 : vector<1x1x32xf32>
    %cst_86 = arith.constant 1.000000e+00 : f32
    %148 = vector.broadcast %cst_86 : f32 to vector<1x1x32xf32>
    %149 = arith.subf %148, %138 : vector<1x1x32xf32>
    %c0_87 = arith.constant 0 : index
    %150 = arith.index_cast %c5_i32 : i32 to index
    %c0_88 = arith.constant 0 : index
    %151 = vector.load %arg1[%c0_87, %150, %c0_88] : memref<1x8x32xf32, #tpu.memory_space<vmem>>, vector<1x1x32xf32>
    %152 = arith.mulf %149, %151 : vector<1x1x32xf32>
    %153 = arith.addf %147, %152 : vector<1x1x32xf32>
    %c0_89 = arith.constant 0 : index
    %154 = arith.index_cast %c5_i32 : i32 to index
    %c0_90 = arith.constant 0 : index
    %155 = vector.load %arg4[%c0_89, %154, %c0_90] : memref<1x8x32xf32, #tpu.memory_space<vmem>>, vector<1x1x32xf32>
    tpu.vector_store %arg4[%c0_89, %154, %c0_90], %153 {strides = array<i32>} : memref<1x8x32xf32, #tpu.memory_space<vmem>>, vector<1x1x32xf32>,
    %c6_i32 = arith.constant 6 : i32
    %c0_91 = arith.constant 0 : index
    %156 = arith.index_cast %c6_i32 : i32 to index
    %c0_92 = arith.constant 0 : index
    %157 = vector.load %arg6[%c0_91, %156, %c0_92] : memref<1x8x32xf32, #tpu.memory_space<vmem>>, vector<1x1x32xf32>
    %c0_93 = arith.constant 0 : index
    %158 = arith.index_cast %c6_i32 : i32 to index
    %c0_94 = arith.constant 0 : index
    %159 = vector.load %arg7[%c0_93, %158, %c0_94] : memref<1x8x32xf32, #tpu.memory_space<vmem>>, vector<1x1x32xf32>
    %160 = arith.mulf %157, %145 : vector<1x1x32xf32>
    %cst_95 = arith.constant 1.000000e+00 : f32
    %161 = vector.broadcast %cst_95 : f32 to vector<1x1x32xf32>
    %162 = arith.subf %161, %157 : vector<1x1x32xf32>
    %c0_96 = arith.constant 0 : index
    %163 = arith.index_cast %c6_i32 : i32 to index
    %c0_97 = arith.constant 0 : index
    %164 = vector.load %arg5[%c0_96, %163, %c0_97] : memref<1x8x32xf32, #tpu.memory_space<vmem>>, vector<1x1x32xf32>
    %165 = arith.mulf %162, %164 : vector<1x1x32xf32>
    %166 = arith.addf %160, %165 : vector<1x1x32xf32>
    %167 = math.tanh %166 : vector<1x1x32xf32>
    %168 = arith.mulf %159, %167 : vector<1x1x32xf32>
    %cst_98 = arith.constant 1.000000e+00 : f32
    %169 = vector.broadcast %cst_98 : f32 to vector<1x1x32xf32>
    %170 = arith.subf %169, %159 : vector<1x1x32xf32>
    %c0_99 = arith.constant 0 : index
    %171 = arith.index_cast %c6_i32 : i32 to index
    %c0_100 = arith.constant 0 : index
    %172 = vector.load %arg1[%c0_99, %171, %c0_100] : memref<1x8x32xf32, #tpu.memory_space<vmem>>, vector<1x1x32xf32>
    %173 = arith.mulf %170, %172 : vector<1x1x32xf32>
    %174 = arith.addf %168, %173 : vector<1x1x32xf32>
    %c0_101 = arith.constant 0 : index
    %175 = arith.index_cast %c6_i32 : i32 to index
    %c0_102 = arith.constant 0 : index
    %176 = vector.load %arg4[%c0_101, %175, %c0_102] : memref<1x8x32xf32, #tpu.memory_space<vmem>>, vector<1x1x32xf32>
    tpu.vector_store %arg4[%c0_101, %175, %c0_102], %174 {strides = array<i32>} : memref<1x8x32xf32, #tpu.memory_space<vmem>>, vector<1x1x32xf32>,
    %c7_i32 = arith.constant 7 : i32
    %c0_103 = arith.constant 0 : index
    %177 = arith.index_cast %c7_i32 : i32 to index
    %c0_104 = arith.constant 0 : index
    %178 = vector.load %arg6[%c0_103, %177, %c0_104] : memref<1x8x32xf32, #tpu.memory_space<vmem>>, vector<1x1x32xf32>
    %c0_105 = arith.constant 0 : index
    %179 = arith.index_cast %c7_i32 : i32 to index
    %c0_106 = arith.constant 0 : index
    %180 = vector.load %arg7[%c0_105, %179, %c0_106] : memref<1x8x32xf32, #tpu.memory_space<vmem>>, vector<1x1x32xf32>
    %181 = arith.mulf %178, %166 : vector<1x1x32xf32>
    %cst_107 = arith.constant 1.000000e+00 : f32
    %182 = vector.broadcast %cst_107 : f32 to vector<1x1x32xf32>
    %183 = arith.subf %182, %178 : vector<1x1x32xf32>
    %c0_108 = arith.constant 0 : index
    %184 = arith.index_cast %c7_i32 : i32 to index
    %c0_109 = arith.constant 0 : index
    %185 = vector.load %arg5[%c0_108, %184, %c0_109] : memref<1x8x32xf32, #tpu.memory_space<vmem>>, vector<1x1x32xf32>
    %186 = arith.mulf %183, %185 : vector<1x1x32xf32>
    %187 = arith.addf %181, %186 : vector<1x1x32xf32>
    %188 = math.tanh %187 : vector<1x1x32xf32>
    %189 = arith.mulf %180, %188 : vector<1x1x32xf32>
    %cst_110 = arith.constant 1.000000e+00 : f32
    %190 = vector.broadcast %cst_110 : f32 to vector<1x1x32xf32>
    %191 = arith.subf %190, %180 : vector<1x1x32xf32>
    %c0_111 = arith.constant 0 : index
    %192 = arith.index_cast %c7_i32 : i32 to index
    %c0_112 = arith.constant 0 : index
    %193 = vector.load %arg1[%c0_111, %192, %c0_112] : memref<1x8x32xf32, #tpu.memory_space<vmem>>, vector<1x1x32xf32>
    %194 = arith.mulf %191, %193 : vector<1x1x32xf32>
    %195 = arith.addf %189, %194 : vector<1x1x32xf32>
    %c0_113 = arith.constant 0 : index
    %196 = arith.index_cast %c7_i32 : i32 to index
    %c0_114 = arith.constant 0 : index
    %197 = vector.load %arg4[%c0_113, %196, %c0_114] : memref<1x8x32xf32, #tpu.memory_space<vmem>>, vector<1x1x32xf32>
    tpu.vector_store %arg4[%c0_113, %196, %c0_114], %195 {strides = array<i32>} : memref<1x8x32xf32, #tpu.memory_space<vmem>>, vector<1x1x32xf32>,
    %c8_i32 = arith.constant 8 : i32
    return
  }
  func.func @transform_0(%arg0: i32) -> (i32, i32, i32) {
    %c0_i32 = arith.constant 0 : i32
    %c0_i32_0 = arith.constant 0 : i32
    %c0_i32_1 = arith.constant 0 : i32
    return %arg0, %c0_i32, %c0_i32_0 : i32, i32, i32
  }
  func.func @transform_1(%arg0: i32) -> (i32, i32) {
    %c0_i32 = arith.constant 0 : i32
    %c0_i32_0 = arith.constant 0 : i32
    %c0_i32_1 = arith.constant 0 : i32
    return %c0_i32, %c0_i32_0 : i32, i32
  }
  func.func @transform_2(%arg0: i32) -> (i32, i32) {
    %c0_i32 = arith.constant 0 : i32
    %c0_i32_0 = arith.constant 0 : i32
    %c0_i32_1 = arith.constant 0 : i32
    return %c0_i32, %c0_i32_0 : i32, i32
  }
  func.func @transform_3(%arg0: i32) -> (i32, i32, i32) {
    %c0_i32 = arith.constant 0 : i32
    %c0_i32_0 = arith.constant 0 : i32
    %c0_i32_1 = arith.constant 0 : i32
    return %arg0, %c0_i32, %c0_i32_0 : i32, i32, i32
  }
}

</mosaic_0001>

<llo_original>
// kernel: tpu_custom_call.1
$region0: #{tpu_custom_call.1}
  #allocation0 [shape = 'u32[]', space=smem, size = 0x4, offset = 0x4, fixed_abs, tag = 'smem constant byte address 0x4 - core index']
  #allocation1 [shape = 'u32[72,128]{1,0:T(1,128)}', space=vmem, size = 0x9000, scoped, tag = 'internal scratch']
  #allocation2 [shape = 'f32[1,8,32]{2,1,0:T(8,128)}', space=vmem, size = 0x1000, scoped, tag = 'scratch operand']
  #allocation3 [shape = 'f32[1,8,32]{2,1,0:T(8,128)}', space=vmem, size = 0x1000, scoped, tag = 'scratch operand']
  #allocation4 [shape = 'f32[1,8,32]{2,1,0:T(8,128)}', space=vmem, size = 0x1000, scoped, tag = 'scratch operand']
  %s0 = inlined_call_operand.hbm [shape: f32[2,8,32], index: 0, kind: input, shape index: {}]
  %s1 = inlined_call_operand.hbm [shape: f32[32,96], index: 1, kind: input, shape index: {}]
  %s2 = inlined_call_operand.hbm [shape: f32[2,32], index: 2, kind: input, shape index: {}]
  %s3 = inlined_call_operand.hbm [shape: f32[2,8,32], index: 3, kind: output, shape index: {}]
  %s4 = sld [smem:[#allocation0]]
  $region57: #{tpu_custom_call.1} parent=0
    _
  %s6 = ssub.s32 1, %s4
  %s7 = scalar_select 0, %s6, %s4
  $region1: #{tpu_custom_call.1} parent=0
    #allocation5 [shape = 'u8[8192]{0}', space=vmem, size = 0x2000, scoped, tag = 'input window, operand 0']
    #allocation6 [shape = 's32[2]{0}', space=sflag, size = 0x8, scoped, tag = 'scoped memory for tpu_custom_call.1']
    #allocation7 [shape = 's32[2]{0}', space=sflag, size = 0x8, scoped, tag = 'scoped memory for tpu_custom_call.1']
    #allocation8 [shape = 'u8[16384]{0}', space=vmem, size = 0x4000, scoped, tag = 'input window, operand 1, single buffered']
    #allocation9 [shape = 's32[1]{0}', space=sflag, size = 0x4, scoped, tag = 'scoped memory for tpu_custom_call.1']
    #allocation10 [shape = 'u8[1024]{0}', space=vmem, size = 0x400, scoped, tag = 'input window, operand 2, single buffered']
    #allocation11 [shape = 'u8[8192]{0}', space=vmem, size = 0x2000, scoped, tag = 'output window, operand 0']
    %8 = vsyncpa [#allocation6], 0
    %s9 = scalar_lea.sflag [#allocation6], 1
    %10 = vsyncpa %s9, 0
    %11 = vsyncpa [#allocation9], 0
    %12 = vsyncpa [#allocation7], 0
    %s13 = scalar_lea.sflag [#allocation7], 1
    %14 = vsyncpa %s13, 0
    loop: start=0, step=1, limit=4
    $region2: #{tpu_custom_call.1} parent=1 // loop_pre_header
      _
    $region3: #{tpu_custom_call.1} parent=1 // loop_header
      %s16 = sphi 0, %s20
      %p17 = scmp.ge.s32.totalorder %s16, 4
      %s26 = sphi 0, %s28
      %s29 = sphi 0, %s26
      %s30 = sphi 0, %s29
      %s46 = sphi 0, %s30
      %s50 = sphi 0, %s50
      %s52 = sphi 0, %s50
      %s53 = sphi 0, %s52
      %s67 = sphi 0, %s53
      %s71 = sphi 0, %s71
      %s73 = sphi 0, %s71
      %s74 = sphi 0, %s73
      %s88 = sphi 0, %s74
      %s94 = sphi 0, %s96
      %s97 = sphi 0, %s94
      %s98 = sphi 0, %s97
      %s114 = sphi 0, %s98
    $region4: #{tpu_custom_call.1} parent=1 // loop_header_branch
      %19 = sbr.rel (%p17) target = $region8
    $region5: #{tpu_custom_call.1} parent=1 // loop_body
      %s21 = ssub.s32 %s16, 1
      %s22 = ssub.s32 %s16, 2
      %s23 = sadd.s32 %s16, 1
      %s24 = ssub.s32 %s16, %s23
      %p25 = scmp.eq.s32.totalorder %s24, 0
      %s27 = sadd.s32 %s26, 1
      %s28 = scalar_select %p25, %s26, %s27
      %p31 = pneg %p25
      %p32 = scmp.eq.s32.totalorder %s16, 1
      %p33 = por %p31, %p32
      %p34 = scmp.ne.s32.totalorder %s26, %s29
      %p35 = scmp.eq.s32.totalorder %s16, 0
      %p36 = por %p34, %p35
      %p37 = scmp.ne.s32.totalorder %s26, %s29
      %p38 = scmp.eq.s32.totalorder %s21, 1
      %p39 = por %p37, %p38
      %p40 = scmp.ne.s32.totalorder %s29, %s30
      %p41 = scmp.eq.s32.totalorder %s21, 0
      %p42 = por %p40, %p41
      %p43 = scmp.ne.s32.totalorder %s29, %s30
      %p44 = scmp.eq.s32.totalorder %s22, 1
      %p45 = por %p43, %p44
      %p47 = scmp.ne.s32.totalorder %s30, %s46
      %p48 = scmp.eq.s32.totalorder %s22, 0
      %p49 = por %p47, %p48
      %s51 = sadd.s32 %s50, 1
      %p54 = scmp.eq.s32.totalorder %s16, 1
      %p55 = scmp.ne.s32.totalorder %s50, %s52
      %p56 = scmp.eq.s32.totalorder %s16, 0
      %p57 = por %p55, %p56
      %p58 = scmp.ne.s32.totalorder %s50, %s52
      %p59 = scmp.eq.s32.totalorder %s21, 1
      %p60 = por %p58, %p59
      %p61 = scmp.ne.s32.totalorder %s52, %s53
      %p62 = scmp.eq.s32.totalorder %s21, 0
      %p63 = por %p61, %p62
      %p64 = scmp.ne.s32.totalorder %s52, %s53
      %p65 = scmp.eq.s32.totalorder %s22, 1
      %p66 = por %p64, %p65
      %p68 = scmp.ne.s32.totalorder %s53, %s67
      %p69 = scmp.eq.s32.totalorder %s22, 0
      %p70 = por %p68, %p69
      %s72 = sadd.s32 %s71, 1
      %p75 = scmp.eq.s32.totalorder %s16, 1
      %p76 = scmp.ne.s32.totalorder %s71, %s73
      %p77 = scmp.eq.s32.totalorder %s16, 0
      %p78 = por %p76, %p77
      %p79 = scmp.ne.s32.totalorder %s71, %s73
      %p80 = scmp.eq.s32.totalorder %s21, 1
      %p81 = por %p79, %p80
      %p82 = scmp.ne.s32.totalorder %s73, %s74
      %p83 = scmp.eq.s32.totalorder %s21, 0
      %p84 = por %p82, %p83
      %p85 = scmp.ne.s32.totalorder %s73, %s74
      %p86 = scmp.eq.s32.totalorder %s22, 1
      %p87 = por %p85, %p86
      %p89 = scmp.ne.s32.totalorder %s74, %s88
      %p90 = scmp.eq.s32.totalorder %s22, 0
      %p91 = por %p89, %p90
      %s92 = ssub.s32 %s16, %s23
      %p93 = scmp.eq.s32.totalorder %s92, 0
      %s95 = sadd.s32 %s94, 1
      %s96 = scalar_select %p93, %s94, %s95
      %p99 = pneg %p93
      %p100 = scmp.eq.s32.totalorder %s16, 1
      %p101 = por %p99, %p100
      %p102 = scmp.ne.s32.totalorder %s94, %s97
      %p103 = scmp.eq.s32.totalorder %s16, 0
      %p104 = por %p102, %p103
      %p105 = scmp.ne.s32.totalorder %s94, %s97
      %p106 = scmp.eq.s32.totalorder %s21, 1
      %p107 = por %p105, %p106
      %p108 = scmp.ne.s32.totalorder %s97, %s98
      %p109 = scmp.eq.s32.totalorder %s21, 0
      %p110 = por %p108, %p109
      %p111 = scmp.ne.s32.totalorder %s97, %s98
      %p112 = scmp.eq.s32.totalorder %s22, 1
      %p113 = por %p111, %p112
      %p115 = scmp.ne.s32.totalorder %s98, %s114
      %p116 = scmp.eq.s32.totalorder %s22, 0
      %p117 = por %p115, %p116
      %p118 = scmp.le.s32.totalorder 1, %s16
      %p119 = scmp.lt.s32.totalorder %s16, 3
      %p120 = pnand %p118, %p119
      %p121 = pneg %p120
      // Predicated region
      $region9: #{tpu_custom_call.1} parent=5 // pred_check
        _
      $region10: #{tpu_custom_call.1} parent=5 // pred_check_branch
        %123 = sbr.rel (%p120) target = $region12
      $region11: #{tpu_custom_call.1} parent=5 // pred_region
        %s124 = ssub.s32 %s16, 1
        // Predicated region
        $region13: #{tpu_custom_call.1} parent=11 // pred_check
          %p125 = pneg %p63
        $region14: #{tpu_custom_call.1} parent=11 // pred_check_branch
          %127 = sbr.rel (%p125) target = $region16
        $region15: #{tpu_custom_call.1} parent=11 // pred_region
          %129 = vsyncadd [#allocation9], 0
          %s130 = sshll.u32 %s1, 4
          %s131 = int_to_ptr.hbm [resolvable:$true] %s130
          %s132 = sshll.u32 [#allocation8], 4
          %s133 = int_to_ptr.vmem [resolvable:$true] %s132
          %138 = dma.hbm_to_vmem [thread:$0]  %s131, 512, %s133, [#allocation9], 128, 128, 8
        $region16: #{tpu_custom_call.1} parent=11 // pred_fallthru
          _
        // Predicated region
        $region17: #{tpu_custom_call.1} parent=11 // pred_check
          %p139 = pneg %p84
        $region18: #{tpu_custom_call.1} parent=11 // pred_check_branch
          %141 = sbr.rel (%p139) target = $region20
        $region19: #{tpu_custom_call.1} parent=11 // pred_region
          %143 = vsyncadd [#allocation9], 0
          %s145 = sshll.u32 %s2, 4
          %s146 = int_to_ptr.hbm [resolvable:$true] %s145
          %s147 = sshll.u32 [#allocation10], 4
          %s148 = int_to_ptr.vmem [resolvable:$true] %s147
          %150 = dma.hbm_to_vmem [thread:$0]  %s146, 32, %s148, [#allocation9]
        $region20: #{tpu_custom_call.1} parent=11 // pred_fallthru
          _
      $region12: #{tpu_custom_call.1} parent=5 // pred_fallthru
        _
      %p151 = scmp.lt.s32.totalorder %s16, 2
      // Predicated region
      $region21: #{tpu_custom_call.1} parent=5 // pred_check
        %p152 = pneg %p151
      $region22: #{tpu_custom_call.1} parent=5 // pred_check_branch
        %154 = sbr.rel (%p152) target = $region24
      $region23: #{tpu_custom_call.1} parent=5 // pred_region
        // Predicated region
        $region25: #{tpu_custom_call.1} parent=23 // pred_check
          %p155 = pneg %p36
        $region26: #{tpu_custom_call.1} parent=23 // pred_check_branch
          %157 = sbr.rel (%p155) target = $region28
        $region27: #{tpu_custom_call.1} parent=23 // pred_region
          %s158 = sand.u32 %s26, 1
          %s159 = scalar_lea.sflag [#allocation6], %s158
          %s160 = sand.u32 %s26, 1
          %s161 = smul.addr %s160, 8
          %s162 = scalar_lea.vmem [#allocation5], %s161
          %164 = vsyncadd %s159, 0
          %s165 = smul.addr %s16, 8
          %s166 = scalar_lea.hbm %s0, %s165
          %s168 = sshll.u32 %s166, 4
          %s169 = int_to_ptr.hbm [resolvable:$true] %s168
          %s170 = sshll.u32 %s162, 4
          %s171 = int_to_ptr.vmem [resolvable:$true] %s170
          %173 = dma.hbm_to_vmem [thread:$0]  %s169, 128, %s171, %s159
        $region28: #{tpu_custom_call.1} parent=23 // pred_fallthru
          _
      $region24: #{tpu_custom_call.1} parent=5 // pred_fallthru
        _
      %p174 = scmp.le.s32.totalorder 1, %s16
      %p175 = scmp.lt.s32.totalorder %s16, 3
      %p176 = pnand %p174, %p175
      %p177 = pneg %p176
      // Predicated region
      $region29: #{tpu_custom_call.1} parent=5 // pred_check
        _
      $region30: #{tpu_custom_call.1} parent=5 // pred_check_branch
        %179 = sbr.rel (%p176) target = $region32
      $region31: #{tpu_custom_call.1} parent=5 // pred_region
        %s180 = ssub.s32 %s16, 1
        %s181 = sand.u32 %s29, 1
        %s182 = scalar_lea.sflag [#allocation6], %s181
        %s183 = sand.u32 %s29, 1
        %s184 = smul.addr %s183, 8
        %s185 = scalar_lea.vmem [#allocation5], %s184
        // Predicated region
        $region33: #{tpu_custom_call.1} parent=31 // pred_check
          %p186 = pneg %p42
        $region34: #{tpu_custom_call.1} parent=31 // pred_check_branch
          %188 = sbr.rel (%p186) target = $region36
        $region35: #{tpu_custom_call.1} parent=31 // pred_region
          %190 = dma.done %s182, 128
        $region36: #{tpu_custom_call.1} parent=31 // pred_fallthru
          _
        // Predicated region
        $region37: #{tpu_custom_call.1} parent=31 // pred_check
          %p191 = pneg %p63
        $region38: #{tpu_custom_call.1} parent=31 // pred_check_branch
          %193 = sbr.rel (%p191) target = $region40
        $region39: #{tpu_custom_call.1} parent=31 // pred_region
          %195 = dma.done [#allocation9], 512
        $region40: #{tpu_custom_call.1} parent=31 // pred_fallthru
          _
        // Predicated region
        $region41: #{tpu_custom_call.1} parent=31 // pred_check
          %p196 = pneg %p84
        $region42: #{tpu_custom_call.1} parent=31 // pred_check_branch
          %198 = sbr.rel (%p196) target = $region44
        $region43: #{tpu_custom_call.1} parent=31 // pred_region
          %200 = dma.done [#allocation9], 32
        $region44: #{tpu_custom_call.1} parent=31 // pred_fallthru
          _
        %s201 = sand.u32 %s29, 1
        %s202 = scalar_lea.sflag [#allocation6], %s201
        %s203 = sand.u32 %s29, 1
        %s204 = smul.addr %s203, 8
        %s205 = scalar_lea.vmem [#allocation5], %s204
        %p206 = pneg %p42
        %p207 = pneg %p39
        %p208 = pneg %p63
        %p209 = pneg %p60
        %p210 = pneg %p84
        %p211 = pneg %p81
        %p212 = pneg %p110
        %p213 = pneg %p107
        %s214 = sand.u32 %s97, 1
        %s215 = scalar_lea.sflag [#allocation7], %s214
        %s216 = sand.u32 %s97, 1
        %s217 = smul.addr %s216, 8
        %s218 = scalar_lea.vmem [#allocation11], %s217
        %v219 = vld [vmem:[%s185] sm:$0xff]
        %v220 = vld [vmem:[#allocation8] sm:$0xff]
        %v221 = vld [vmem:[#allocation8 + $0x8] sm:$0xff]
        %v222 = vld [vmem:[#allocation8 + $0x10] sm:$0xff]
        %v223 = vld [vmem:[#allocation8 + $0x18] sm:$0xff]
        %vm224 = vcmask 261120
        %v226 = vsel %vm224, %v219, 0
        %228 = vmatpush.msra.mxu0 0.0
        %229 = vmatpush.msra.mxu0 0.0
        %230 = vmatpush.msra.mxu0 0.0
        %231 = vmatpush.msra.mxu0 0.0
        %232 = vmatpush.msra.mxu0 0.0
        %233 = vmatpush.msra.mxu0 0.0
        %234 = vmatpush.msra.mxu0 0.0
        %235 = vmatpush.msra.mxu0 0.0
        %236 = vmatpush.msra.mxu0 0.0
        %237 = vmatpush.msra.mxu0 0.0
        %238 = vmatpush.msra.mxu0 0.0
        %239 = vmatpush.msra.mxu0 0.0
        %240 = vmatpush.msra.mxu0 %v223
        %241 = vmatpush.msra.mxu0 %v222
        %242 = vmatpush.msra.mxu0 %v221
        %243 = vmatpush.msra.mxu0 %v220
        %244 = vmatmul.f32.gmra.mxu0 %v226
        %v245 = vpop.f32.mrf.mxu0
        %v246 = vadd.f32 0.0, %v245
        %247 = vdwg.mxu0
        %248 = vst.msk [vmem:[#allocation2] sm:$0xff] %vm224, %v246
        %v249 = vld [vmem:[#allocation10] sm:$0x1]
        %v250 = vperm.slane %v249, 0
        %252 = vrot.lane.b32.xlu0 %v250, 32
        %v253 = vpop.permute.xlu0 %252
        %v255 = vadd.f32 %v246, %v253
        %v256 = vxor.u32 %v255, 2147483648
        %v257 = vmul.f32 %v256, 1.442695
        %v258 = vpow.pop %v257
        %v259 = vadd.f32 %v258, 1.0
        %v260 = vrcp.pop %v259
        %v261 = vmul.f32 %v259, %v260
        %v262 = vsub.f32 1.0, %v261
        %v263 = vmul.f32 %v260, %v262
        %v264 = vadd.f32 %v260, %v263
        %vm265 = vweird.f32 %v259
        %vm266 = vweird.f32 %v260
        %vm267 = vmor %vm265, %vm266
        %v268 = vsel %vm267, %v260, %v264
        %v269 = vand.u32 2147483647, %v259
        %vm270 = vcmp.eq.f32.partialorder %v269, 8.507059e+37
        %v271 = vand.u32 %v259, 2147483648
        %v272 = vor.u32 1.1754944e-38, %v271
        %v273 = vsel %vm270, %v272, %v268
        %v274 = vmul.f32 1.0, %v273
        %276 = vrot.lane.b32.xlu0 %v274, 96
        %v277 = vpop.permute.xlu0 %276
        %279 = vst.msk [vmem:[#allocation3] sm:$0xff] %vm224, %v277
        %v280 = vld [vmem:[#allocation10 + $0x1] sm:$0x1]
        %v281 = vperm.slane %v280, 0
        %283 = vrot.lane.b32.xlu0 %v281, 64
        %v284 = vpop.permute.xlu0 %283
        %v286 = vadd.f32 %v246, %v284
        %v287 = vxor.u32 %v286, 2147483648
        %v288 = vmul.f32 %v287, 1.442695
        %v289 = vpow.pop %v288
        %v290 = vadd.f32 %v289, 1.0
        %v291 = vrcp.pop %v290
        %v292 = vmul.f32 %v290, %v291
        %v293 = vsub.f32 1.0, %v292
        %v294 = vmul.f32 %v291, %v293
        %v295 = vadd.f32 %v291, %v294
        %vm296 = vweird.f32 %v290
        %vm297 = vweird.f32 %v291
        %vm298 = vmor %vm296, %vm297
        %v299 = vsel %vm298, %v291, %v295
        %v300 = vand.u32 2147483647, %v290
        %vm301 = vcmp.eq.f32.partialorder %v300, 8.507059e+37
        %v302 = vand.u32 %v290, 2147483648
        %v303 = vor.u32 1.1754944e-38, %v302
        %v304 = vsel %vm301, %v303, %v299
        %v305 = vmul.f32 1.0, %v304
        %307 = vrot.lane.b32.xlu0 %v305, 64
        %v308 = vpop.permute.xlu0 %307
        %310 = vst.msk [vmem:[#allocation4] sm:$0xff] %vm224, %v308
        %v311 = vld [vmem:[#allocation3] sm:$0x1]
        %v312 = vld [vmem:[#allocation4] sm:$0x1]
        %v313 = vmul.f32 %v311, 0.0
        %v314 = vsub.f32 1.0, %v311
        %v315 = vld [vmem:[#allocation2] sm:$0x1]
        %v316 = vmul.f32 %v314, %v315
        %v317 = vadd.f32 %v313, %v316
        %v318 = vtanh.pop %v317
        %v319 = vmul.f32 %v312, %v318
        %v320 = vsub.f32 1.0, %v312
        %v321 = vld [vmem:[%s185] sm:$0x1]
        %v322 = vmul.f32 %v320, %v321
        %v323 = vadd.f32 %v319, %v322
        %vm324 = vcmask 253952
        %325 = vst.msk [vmem:[%s218] sm:$0x1] %vm324, %v323
        %v326 = vld [vmem:[#allocation3 + $0x1] sm:$0x1]
        %v327 = vld [vmem:[#allocation4 + $0x1] sm:$0x1]
        %v328 = vmul.f32 %v326, %v317
        %v329 = vsub.f32 1.0, %v326
        %v330 = vld [vmem:[#allocation2 + $0x1] sm:$0x1]
        %v331 = vmul.f32 %v329, %v330
        %v332 = vadd.f32 %v328, %v331
        %v333 = vtanh.pop %v332
        %v334 = vmul.f32 %v327, %v333
        %v335 = vsub.f32 1.0, %v327
        %v336 = vld [vmem:[%s185 + $0x1] sm:$0x1]
        %v337 = vmul.f32 %v335, %v336
        %v338 = vadd.f32 %v334, %v337
        %339 = vst.msk [vmem:[%s218 + $0x1] sm:$0x1] %vm324, %v338
        %v340 = vld [vmem:[#allocation3 + $0x2] sm:$0x1]
        %v341 = vld [vmem:[#allocation4 + $0x2] sm:$0x1]
        %v342 = vmul.f32 %v340, %v332
        %v343 = vsub.f32 1.0, %v340
        %v344 = vld [vmem:[#allocation2 + $0x2] sm:$0x1]
        %v345 = vmul.f32 %v343, %v344
        %v346 = vadd.f32 %v342, %v345
        %v347 = vtanh.pop %v346
        %v348 = vmul.f32 %v341, %v347
        %v349 = vsub.f32 1.0, %v341
        %v350 = vld [vmem:[%s185 + $0x2] sm:$0x1]
        %v351 = vmul.f32 %v349, %v350
        %v352 = vadd.f32 %v348, %v351
        %353 = vst.msk [vmem:[%s218 + $0x2] sm:$0x1] %vm324, %v352
        %v354 = vld [vmem:[#allocation3 + $0x3] sm:$0x1]
        %v355 = vld [vmem:[#allocation4 + $0x3] sm:$0x1]
        %v356 = vmul.f32 %v354, %v346
        %v357 = vsub.f32 1.0, %v354
        %v358 = vld [vmem:[#allocation2 + $0x3] sm:$0x1]
        %v359 = vmul.f32 %v357, %v358
        %v360 = vadd.f32 %v356, %v359
        %v361 = vtanh.pop %v360
        %v362 = vmul.f32 %v355, %v361
        %v363 = vsub.f32 1.0, %v355
        %v364 = vld [vmem:[%s185 + $0x3] sm:$0x1]
        %v365 = vmul.f32 %v363, %v364
        %v366 = vadd.f32 %v362, %v365
        %367 = vst.msk [vmem:[%s218 + $0x3] sm:$0x1] %vm324, %v366
        %v368 = vld [vmem:[#allocation3 + $0x4] sm:$0x1]
        %v369 = vld [vmem:[#allocation4 + $0x4] sm:$0x1]
        %v370 = vmul.f32 %v368, %v360
        %v371 = vsub.f32 1.0, %v368
        %v372 = vld [vmem:[#allocation2 + $0x4] sm:$0x1]
        %v373 = vmul.f32 %v371, %v372
        %v374 = vadd.f32 %v370, %v373
        %v375 = vtanh.pop %v374
        %v376 = vmul.f32 %v369, %v375
        %v377 = vsub.f32 1.0, %v369
        %v378 = vld [vmem:[%s185 + $0x4] sm:$0x1]
        %v379 = vmul.f32 %v377, %v378
        %v380 = vadd.f32 %v376, %v379
        %381 = vst.msk [vmem:[%s218 + $0x4] sm:$0x1] %vm324, %v380
        %v382 = vld [vmem:[#allocation3 + $0x5] sm:$0x1]
        %v383 = vld [vmem:[#allocation4 + $0x5] sm:$0x1]
        %v384 = vmul.f32 %v382, %v374
        %v385 = vsub.f32 1.0, %v382
        %v386 = vld [vmem:[#allocation2 + $0x5] sm:$0x1]
        %v387 = vmul.f32 %v385, %v386
        %v388 = vadd.f32 %v384, %v387
        %v389 = vtanh.pop %v388
        %v390 = vmul.f32 %v383, %v389
        %v391 = vsub.f32 1.0, %v383
        %v392 = vld [vmem:[%s185 + $0x5] sm:$0x1]
        %v393 = vmul.f32 %v391, %v392
        %v394 = vadd.f32 %v390, %v393
        %395 = vst.msk [vmem:[%s218 + $0x5] sm:$0x1] %vm324, %v394
        %v396 = vld [vmem:[#allocation3 + $0x6] sm:$0x1]
        %v397 = vld [vmem:[#allocation4 + $0x6] sm:$0x1]
        %v398 = vmul.f32 %v396, %v388
        %v399 = vsub.f32 1.0, %v396
        %v400 = vld [vmem:[#allocation2 + $0x6] sm:$0x1]
        %v401 = vmul.f32 %v399, %v400
        %v402 = vadd.f32 %v398, %v401
        %v403 = vtanh.pop %v402
        %v404 = vmul.f32 %v397, %v403
        %v405 = vsub.f32 1.0, %v397
        %v406 = vld [vmem:[%s185 + $0x6] sm:$0x1]
        %v407 = vmul.f32 %v405, %v406
        %v408 = vadd.f32 %v404, %v407
        %409 = vst.msk [vmem:[%s218 + $0x6] sm:$0x1] %vm324, %v408
        %v410 = vld [vmem:[#allocation3 + $0x7] sm:$0x1]
        %v411 = vld [vmem:[#allocation4 + $0x7] sm:$0x1]
        %v412 = vmul.f32 %v410, %v402
        %v413 = vsub.f32 1.0, %v410
        %v414 = vld [vmem:[#allocation2 + $0x7] sm:$0x1]
        %v415 = vmul.f32 %v413, %v414
        %v416 = vadd.f32 %v412, %v415
        %v417 = vtanh.pop %v416
        %v418 = vmul.f32 %v411, %v417
        %v419 = vsub.f32 1.0, %v411
        %v420 = vld [vmem:[%s185 + $0x7] sm:$0x1]
        %v421 = vmul.f32 %v419, %v420
        %v422 = vadd.f32 %v418, %v421
        %423 = vst.msk [vmem:[%s218 + $0x7] sm:$0x1] %vm324, %v422
        %s424 = sand.u32 %s97, 1
        %s425 = scalar_lea.sflag [#allocation7], %s424
        %s426 = sand.u32 %s97, 1
        %s427 = smul.addr %s426, 8
        %s428 = scalar_lea.vmem [#allocation11], %s427
        // Predicated region
        $region45: #{tpu_custom_call.1} parent=31 // pred_check
          %p429 = pneg %p107
        $region46: #{tpu_custom_call.1} parent=31 // pred_check_branch
          %431 = sbr.rel (%p429) target = $region48
        $region47: #{tpu_custom_call.1} parent=31 // pred_region
          %433 = vsyncadd %s425, 0
          %s434 = smul.addr %s21, 8
          %s435 = scalar_lea.hbm %s3, %s434
          %s437 = sshll.u32 %s428, 4
          %s438 = int_to_ptr.vmem [resolvable:$true] %s437
          %s439 = sshll.u32 %s435, 4
          %s440 = int_to_ptr.hbm [resolvable:$true] %s439
          %442 = dma.vmem_to_hbm [thread:$0]  %s438, 128, %s440, %s425
        $region48: #{tpu_custom_call.1} parent=31 // pred_fallthru
          _
      $region32: #{tpu_custom_call.1} parent=5 // pred_fallthru
        _
      %p443 = scmp.le.s32.totalorder 2, %s16
      // Predicated region
      $region49: #{tpu_custom_call.1} parent=5 // pred_check
        %p444 = pneg %p443
      $region50: #{tpu_custom_call.1} parent=5 // pred_check_branch
        %446 = sbr.rel (%p444) target = $region52
      $region51: #{tpu_custom_call.1} parent=5 // pred_region
        %s447 = ssub.s32 %s16, 2
        // Predicated region
        $region53: #{tpu_custom_call.1} parent=51 // pred_check
          %p448 = pneg %p113
        $region54: #{tpu_custom_call.1} parent=51 // pred_check_branch
          %450 = sbr.rel (%p448) target = $region56
        $region55: #{tpu_custom_call.1} parent=51 // pred_region
          %s451 = sand.u32 %s98, 1
          %s452 = scalar_lea.sflag [#allocation7], %s451
          %s453 = sand.u32 %s98, 1
          %s454 = smul.addr %s453, 8
          %s455 = scalar_lea.vmem [#allocation11], %s454
          %457 = dma.done %s452, 128
        $region56: #{tpu_custom_call.1} parent=51 // pred_fallthru
          _
      $region52: #{tpu_custom_call.1} parent=5 // pred_fallthru
        _
    $region6: #{tpu_custom_call.1} parent=1 // loop_footer
      %s20 = sadd.s32 1, %s16
    $region7: #{tpu_custom_call.1} parent=1 // loop_footer_branch
      %15 = sbr.rel target = $region3
    $region8: #{tpu_custom_call.1} parent=1 // loop_exit
      _
    %458 = vsyncpa [#allocation6], 1
    %s459 = scalar_lea.sflag [#allocation6], 1
    %460 = vsyncpa %s459, 1
    %461 = vsyncpa [#allocation9], 1
    %462 = vsyncpa [#allocation7], 1
    %s463 = scalar_lea.sflag [#allocation7], 1
    %464 = vsyncpa %s463, 1

</llo_original>
